<compile_context>
chip_gen: v7x
topology: tpu7x:2x2x1
jax: 0.10.0
libtpu: 0.0.40
codegen_flags: <defaults>
</compile_context>

<pallas_src>
import jax
import jax.numpy as jnp
from jax.experimental import pallas as pl
from jax.experimental.pallas import tpu as pltpu


def _round_up(x, m):
    return ((x + m - 1) // m) * m


def _row_tile(n):
    """16-aligned row tile (bf16 sublane packing); 256 at large N, ~4 tiles at small N."""
    if n >= 1024:
        return 256
    t = _round_up(max(pl.cdiv(n, 4), 8), 16)
    return min(t, _round_up(n, 16))


def _vocab_tile(vp):
    """Largest of {2048,1024,512,256,128} that divides Vp (Vp is a multiple of 128)."""
    for tv in (2048, 1024, 512, 256, 128):
        if vp % tv == 0:
            return tv
    return vp


def _vmem_cap_bytes():
    """Generation-aware scoped-VMEM cap: ~56 MiB on 64-MiB parts (v7x per-TC),
    ~100 MiB on 128-MiB parts (v5e/v6e)."""
    try:
        phys = pltpu.get_tpu_info().vmem_capacity_bytes
    except Exception:
        phys = 64 << 20  # conservative default if the query is unavailable
    return (56 << 20) if phys <= (64 << 20) else (100 << 20)


def _resident_spec(shape, index_map):
    """Single-buffered BlockSpec for tensors with a constant index_map (fetched once).
    Falls back to the default (double-buffered) spec if pipeline_mode is unavailable."""
    try:
        return pl.BlockSpec(shape, index_map, pipeline_mode=pl.Buffered(1))
    except TypeError:
        return pl.BlockSpec(shape, index_map)


# ----------------------------------------------------------------------------
# Pallas kernel: LM head (embedding activations -> Linear+tanh -> vocab logits)
# ----------------------------------------------------------------------------
def _lm_head_kernel(x_ref, w1_ref, b1_ref, wv_ref, bv_ref, out_ref, h_ref):
    """Grid (i = row tile [parallel], j = vocab tile [arbitrary, innermost]).

    j == 0 : h = tanh(x @ W1 + b1) for this row tile -> bf16 VMEM scratch.
    every j: out[i, j] = h @ Wv[:, j] + bv[j]   (fp32 accumulate, bf16 store).
    """
    @pl.when(pl.program_id(1) == 0)
    def _():
        h_ref[...] = jnp.tanh(
            jnp.dot(x_ref[...], w1_ref[...], preferred_element_type=jnp.float32)
            + b1_ref[...]
        ).astype(h_ref.dtype)

    out_ref[...] = (
        jnp.dot(h_ref[...], wv_ref[...], preferred_element_type=jnp.float32)
        + bv_ref[...]
    ).astype(out_ref.dtype)


# ----------------------------------------------------------------------------
# Wrappers
# ----------------------------------------------------------------------------
def model_forward(input_ids, attention_mask, params):
    """LanguageGAN.forward(**param) == self.model(**param); returns per-token logits
    of shape (B, L, vocab) as output[0] (bf16)."""
    del attention_mask  # TODO(synk): a real HF model would mask padded positions; the
    #                     synthetic per-token LM head does not consume the mask.
    B, L = input_ids.shape
    V = params["vocab"]
    emb = params["emb"]                                   # (V, Dp) bf16
    Dp = emb.shape[1]
    Vp = params["wv"].shape[1]
    N = B * L

    tn = _row_tile(N)
    Np = _round_up(N, tn)
    tv = _vocab_tile(Vp)
    n_row, n_voc = Np // tn, Vp // tv

    # Embedding lookup as an XLA gather: N*Dp*2 bytes instead of an (N, V) one-hot.
    # Pad the cheap int32 ids (not the gathered activations) so exactly Np rows come
    # out of the gather and no post-kernel row slice is needed when tn | N.
    # TODO(synk): fuse the gather into the kernel (scalar-prefetched ids + manual DMA)
    # to remove the HBM round-trip of the (N, Dp) activations.
    ids = input_ids.reshape(N)
    if Np != N:
        ids = jnp.pad(ids, (0, Np - N))
    x = jnp.take(emb, ids, axis=0)                        # (Np, Dp) bf16

    # VMEM budget: 2x streamed (double-buffered) tiles + 1x resident weights/scratch.
    stream_bytes = tn * Dp * 2 + Dp * tv * 2 + tv * 4 + tn * tv * 2
    resident_bytes = Dp * Dp * 2 + Dp * 4 + tn * Dp * 2
    vmem_bytes = min(max(2 * stream_bytes + resident_bytes + (2 << 20), 16 << 20),
                     _vmem_cap_bytes())

    cost = pl.CostEstimate(
        flops=2 * Np * Dp * Dp + 2 * Np * Dp * Vp,
        transcendentals=Np * Dp,
        bytes_accessed=(Np * Dp * 2                         # activations (read once)
                        + Dp * Dp * 2 + Dp * 4              # w1/b1 (fetched once)
                        + n_row * (Dp * Vp * 2 + Vp * 4)    # wv/bv re-streamed per row tile
                        + Np * Vp * 2),                     # bf16 logits writeback
    )

    const2d = lambda i, j: (0, 0)
    logits = pl.pallas_call(
        _lm_head_kernel,
        out_shape=jax.ShapeDtypeStruct((Np, Vp), jnp.bfloat16),
        grid=(n_row, n_voc),
        in_specs=[
            pl.BlockSpec((tn, Dp), lambda i, j: (i, 0)),    # x: revisited across j
            _resident_spec((Dp, Dp), const2d),              # w1: single-buffered
            _resident_spec((1, Dp), const2d),               # b1: single-buffered
            pl.BlockSpec((Dp, tv), lambda i, j: (0, j)),    # wv: streamed per vocab tile
            pl.BlockSpec((1, tv), lambda i, j: (0, j)),     # bv: streamed per vocab tile
        ],
        out_specs=pl.BlockSpec((tn, tv), lambda i, j: (i, j)),   # lane-dense bf16 store
        scratch_shapes=[pltpu.VMEM((tn, Dp), jnp.bfloat16)],     # h, persists across j
        compiler_params=pltpu.CompilerParams(
            dimension_semantics=("parallel", "arbitrary"),
            vmem_limit_bytes=vmem_bytes,
        ),
        cost_estimate=cost,
    )(x, params["w1"], params["b1"], params["wv"], params["bv"])

    if Np != N:                       # only when tn does not divide B*L
        logits = logits[:N]
    logits = logits.reshape(B, L, Vp)  # free view: contiguous, N == B*L
    if Vp != V:                        # only when vocab is not 128-aligned
        logits = logits[..., :V]
    return (logits,)


def discriminator_forward(trajectory_f32, params):
    """Discriminator(L_tot): Linear -> LeakyReLU(0.2) -> Linear -> Sigmoid -> (B, 1).

    Per the performance review this stays plain XLA: at (B, L_tot) = (2, 16) a
    pallas_call's DMA/setup overhead dwarfs the few-kFLOP MLP, so removing the kernel
    is pure overhead removal with identical math."""
    h = trajectory_f32 @ params["wd1"] + params["bd1"]
    h = jnp.where(h > 0, h, 0.2 * h)
    logit = jnp.sum(h * params["wd2t"], axis=-1, keepdims=True) + params["bd2"]
    return jax.nn.sigmoid(logit)


def init_params(key, vocab, embed_dim, l_total, disc_hidden):
    """bf16 LM weights with feature dims zero-padded to 128 lanes (padding rows/cols
    are zero, so padded math equals unpadded math up to bf16 rounding).
    TODO(synk): on v6e/v7x pad Dp/tv to 256 once the real embed_dim is large enough to
    amortize the extra zero compute (2x256x256 MXU); at embed_dim=32 it is not."""
    Dp = _round_up(embed_dim, 128)
    Vp = _round_up(vocab, 128)
    ks = jax.random.split(key, 5)

    def dense(k, shape, scale, pad_to, dtype):
        w = (scale * jax.random.normal(k, shape)).astype(jnp.float32)
        w = jnp.pad(w, [(0, p - s) for s, p in zip(shape, pad_to)])
        return w.astype(dtype)

    return {
        "vocab": vocab,
        # EmbeddingGenerator: frozen embedding table + tunable layer1 Linear(D, D)
        "emb": dense(ks[0], (vocab, embed_dim), 0.02, (vocab, Dp), jnp.bfloat16),
        "w1":  dense(ks[1], (embed_dim, embed_dim), 0.1, (Dp, Dp), jnp.bfloat16),
        "b1":  jnp.zeros((1, Dp), jnp.float32),
        # vocab head of the synthetic LM
        "wv":  dense(ks[2], (embed_dim, vocab), 0.1, (Dp, Vp), jnp.bfloat16),
        "bv":  jnp.zeros((1, Vp), jnp.float32),
        # Discriminator(max_length_input + max_new_tokens), plain-XLA fp32
        "wd1":  dense(ks[3], (l_total, disc_hidden), 0.1, (l_total, disc_hidden), jnp.float32),
        "bd1":  jnp.zeros((1, disc_hidden), jnp.float32),
        "wd2t": dense(ks[4], (1, disc_hidden), 0.1, (1, disc_hidden), jnp.float32),
        "bd2":  jnp.zeros((1, 1), jnp.float32),
    }


if __name__ == "__main__":
    # Small, shape-consistent configuration.
    batch = 2
    max_length_input = 8
    max_new_tokens = 8
    l_total = max_length_input + max_new_tokens   # discriminator input dim
    vocab = 128          # 128-aligned -> lane-dense logits, no post-kernel vocab slice
    embed_dim = 32
    disc_hidden = 32

    key = jax.random.PRNGKey(0)
    k_ids, k_traj, k_params = jax.random.split(key, 3)

    params = init_params(k_params, vocab, embed_dim, l_total, disc_hidden)

    # forward(**param): per-token logits over the (question + generated) sequence.
    input_ids = jax.random.randint(k_ids, (batch, l_total), 0, vocab, dtype=jnp.int32)
    attention_mask = jnp.ones((batch, l_total), jnp.int32)
    logits = model_forward(input_ids, attention_mask, params)[0]
    logits = jax.block_until_ready(logits)
    assert logits.shape == (batch, l_total, vocab)
    assert bool(jnp.all(jnp.isfinite(logits.astype(jnp.float32))))

    # Discriminator path (trajectory.type(torch.float32) -> (B, 1) sigmoid scores).
    trajectory = jax.random.randint(k_traj, (batch, l_total), 0, vocab,
                                    dtype=jnp.int32).astype(jnp.float32)
    scores = discriminator_forward(trajectory, params)
    scores = jax.block_until_ready(scores)
    assert scores.shape == (batch, 1)
    assert bool(jnp.all((scores >= 0.0) & (scores <= 1.0)))

    print("KERNEL_OK")
</pallas_src>

<mosaic_0001>
module attributes {stable_mosaic.version = 11 : i64} {
  func.func @_lm_head_kernel(%arg0: i32, %arg1: i32, %arg2: memref<16x128xbf16, #tpu.memory_space<vmem>>, %arg3: memref<128x128xbf16, #tpu.memory_space<vmem>>, %arg4: memref<1x128xf32, #tpu.memory_space<vmem>>, %arg5: memref<128x128xbf16, #tpu.memory_space<vmem>>, %arg6: memref<1x128xf32, #tpu.memory_space<vmem>>, %arg7: memref<16x128xbf16, #tpu.memory_space<vmem>>, %arg8: memref<16x128xbf16, #tpu.memory_space<vmem>>) attributes {dimension_semantics = [#tpu.dimension_semantics<parallel>, #tpu.dimension_semantics<arbitrary>], iteration_bounds = array<i64: 2, 1>, scalar_prefetch = 0 : i64, scratch_operands = 1 : i64, tpu.core_type = #tpu.core_type<tc>, window_params = [{transform_indices = @transform_0, window_bounds = array<i64: 16, 128>}, {pipeline_mode = #tpu.pipeline_mode<synchronous>, transform_indices = @transform_1, window_bounds = array<i64: 128, 128>}, {pipeline_mode = #tpu.pipeline_mode<synchronous>, transform_indices = @transform_2, window_bounds = array<i64: 1, 128>}, {transform_indices = @transform_3, window_bounds = array<i64: 128, 128>}, {transform_indices = @transform_4, window_bounds = array<i64: 1, 128>}, {transform_indices = @transform_5, window_bounds = array<i64: 16, 128>}]} {
    %c0_i32 = arith.constant 0 : i32
    %0 = arith.cmpi eq, %arg1, %c0_i32 : i32
    %1 = arith.extui %0 : i1 to i32
    %c0_i32_0 = arith.constant 0 : i32
    %2 = arith.cmpi ne, %1, %c0_i32_0 : i32
    scf.if %2 {
      %c0_8 = arith.constant 0 : index
      %c0_9 = arith.constant 0 : index
      %11 = vector.load %arg2[%c0_8, %c0_9] : memref<16x128xbf16, #tpu.memory_space<vmem>>, vector<16x128xbf16>
      %c0_10 = arith.constant 0 : index
      %c0_11 = arith.constant 0 : index
      %12 = vector.load %arg3[%c0_10, %c0_11] : memref<128x128xbf16, #tpu.memory_space<vmem>>, vector<128x128xbf16>
      %cst_12 = arith.constant dense<0.000000e+00> : vector<16x128xf32>
      %13 = tpu.matmul %11, %12, %cst_12 {dimension_numbers = #tpu.dot_dimension_numbers<[1], [0], [0], [1], [0, 0, 1, 1], [], []>} : vector<16x128xbf16>, vector<128x128xbf16>, vector<16x128xf32> -> vector<16x128xf32>
      %c0_13 = arith.constant 0 : index
      %c0_14 = arith.constant 0 : index
      %14 = vector.load %arg4[%c0_13, %c0_14] : memref<1x128xf32, #tpu.memory_space<vmem>>, vector<1x128xf32>
      %15 = vector.broadcast %14 : vector<1x128xf32> to vector<16x128xf32>
      %16 = arith.addf %13, %15 : vector<16x128xf32>
      %17 = math.tanh %16 : vector<16x128xf32>
      %18 = arith.truncf %17 : vector<16x128xf32> to vector<16x128xbf16>
      %c0_15 = arith.constant 0 : index
      %c0_16 = arith.constant 0 : index
      %19 = vector.load %arg8[%c0_15, %c0_16] : memref<16x128xbf16, #tpu.memory_space<vmem>>, vector<16x128xbf16>
      tpu.vector_store %arg8[%c0_15, %c0_16], %18 {strides = array<i32>} : memref<16x128xbf16, #tpu.memory_space<vmem>>, vector<16x128xbf16>,
    } else {
    }
    %c0 = arith.constant 0 : index
    %c0_1 = arith.constant 0 : index
    %3 = vector.load %arg8[%c0, %c0_1] : memref<16x128xbf16, #tpu.memory_space<vmem>>, vector<16x128xbf16>
    %c0_2 = arith.constant 0 : index
    %c0_3 = arith.constant 0 : index
    %4 = vector.load %arg5[%c0_2, %c0_3] : memref<128x128xbf16, #tpu.memory_space<vmem>>, vector<128x128xbf16>
    %cst = arith.constant dense<0.000000e+00> : vector<16x128xf32>
    %5 = tpu.matmul %3, %4, %cst {dimension_numbers = #tpu.dot_dimension_numbers<[1], [0], [0], [1], [0, 0, 1, 1], [], []>} : vector<16x128xbf16>, vector<128x128xbf16>, vector<16x128xf32> -> vector<16x128xf32>
    %c0_4 = arith.constant 0 : index
    %c0_5 = arith.constant 0 : index
    %6 = vector.load %arg6[%c0_4, %c0_5] : memref<1x128xf32, #tpu.memory_space<vmem>>, vector<1x128xf32>
    %7 = vector.broadcast %6 : vector<1x128xf32> to vector<16x128xf32>
    %8 = arith.addf %5, %7 : vector<16x128xf32>
    %9 = arith.truncf %8 : vector<16x128xf32> to vector<16x128xbf16>
    %c0_6 = arith.constant 0 : index
    %c0_7 = arith.constant 0 : index
    %10 = vector.load %arg7[%c0_6, %c0_7] : memref<16x128xbf16, #tpu.memory_space<vmem>>, vector<16x128xbf16>
    tpu.vector_store %arg7[%c0_6, %c0_7], %9 {strides = array<i32>} : memref<16x128xbf16, #tpu.memory_space<vmem>>, vector<16x128xbf16>,
    return
  }
  func.func @transform_0(%arg0: i32, %arg1: i32) -> (i32, i32) {
    %c0_i32 = arith.constant 0 : i32
    %c0_i32_0 = arith.constant 0 : i32
    return %arg0, %c0_i32 : i32, i32
  }
  func.func @transform_1(%arg0: i32, %arg1: i32) -> (i32, i32) {
    %c0_i32 = arith.constant 0 : i32
    %c0_i32_0 = arith.constant 0 : i32
    %c0_i32_1 = arith.constant 0 : i32
    return %c0_i32, %c0_i32_0 : i32, i32
  }
  func.func @transform_2(%arg0: i32, %arg1: i32) -> (i32, i32) {
    %c0_i32 = arith.constant 0 : i32
    %c0_i32_0 = arith.constant 0 : i32
    %c0_i32_1 = arith.constant 0 : i32
    return %c0_i32, %c0_i32_0 : i32, i32
  }
  func.func @transform_3(%arg0: i32, %arg1: i32) -> (i32, i32) {
    %c0_i32 = arith.constant 0 : i32
    %c0_i32_0 = arith.constant 0 : i32
    return %c0_i32, %arg1 : i32, i32
  }
  func.func @transform_4(%arg0: i32, %arg1: i32) -> (i32, i32) {
    %c0_i32 = arith.constant 0 : i32
    %c0_i32_0 = arith.constant 0 : i32
    return %c0_i32, %arg1 : i32, i32
  }
  func.func @transform_5(%arg0: i32, %arg1: i32) -> (i32, i32) {
    %c0_i32 = arith.constant 0 : i32
    return %arg0, %arg1 : i32, i32
  }
}

</mosaic_0001>

<llo_original>
// kernel: tpu_custom_call.1
$region0: #{tpu_custom_call.1}
  #allocation0 [shape = 'u32[]', space=smem, size = 0x4, offset = 0x4, fixed_abs, tag = 'smem constant byte address 0x4 - core index']
  #allocation1 [shape = 'u32[144,128]{1,0:T(1,128)}', space=vmem, size = 0x12000, scoped, tag = 'internal scratch']
  #allocation2 [shape = 'bf16[16,128]{1,0:T(16,128)(2,1)}', space=vmem, size = 0x1000, scoped, tag = 'scratch operand']
  %s0 = inlined_call_operand.hbm [shape: bf16[32,128], index: 0, kind: input, shape index: {}]
  %s1 = inlined_call_operand.hbm [shape: bf16[128,128], index: 1, kind: input, shape index: {}]
  %s2 = inlined_call_operand.vmem [shape: f32[1,128], index: 2, kind: input, shape index: {}]
  %s3 = inlined_call_operand.hbm [shape: bf16[128,128], index: 3, kind: input, shape index: {}]
  %s4 = inlined_call_operand.vmem [shape: f32[1,128], index: 4, kind: input, shape index: {}]
  %s5 = inlined_call_operand.hbm [shape: bf16[32,128], index: 5, kind: output, shape index: {}]
  %s6 = sld [smem:[#allocation0]]
  $region69: #{tpu_custom_call.1} parent=0
    _
  %s8 = ssub.s32 1, %s6
  %s9 = scalar_select 0, %s8, %s6
  $region1: #{tpu_custom_call.1} parent=0
    #allocation3 [shape = 'u8[8192]{0}', space=vmem, size = 0x2000, scoped, tag = 'input window, operand 0']
    #allocation4 [shape = 's32[2]{0}', space=sflag, size = 0x8, scoped, tag = 'scoped memory for tpu_custom_call.1']
    #allocation5 [shape = 's32[2]{0}', space=sflag, size = 0x8, scoped, tag = 'scoped memory for tpu_custom_call.1']
    #allocation6 [shape = 'u8[32768]{0}', space=vmem, size = 0x8000, scoped, tag = 'input window, operand 1, single buffered']
    #allocation7 [shape = 's32[1]{0}', space=sflag, size = 0x4, scoped, tag = 'scoped memory for tpu_custom_call.1']
    #allocation8 [shape = 'u8[32768]{0}', space=vmem, size = 0x8000, scoped, tag = 'input window, operand 3, single buffered']
    #allocation9 [shape = 'u8[8192]{0}', space=vmem, size = 0x2000, scoped, tag = 'output window, operand 0']
    %10 = vsyncpa [#allocation4], 0
    %s11 = scalar_lea.sflag [#allocation4], 1
    %12 = vsyncpa %s11, 0
    %13 = vsyncpa [#allocation7], 0
    %14 = vsyncpa [#allocation5], 0
    %s15 = scalar_lea.sflag [#allocation5], 1
    %16 = vsyncpa %s15, 0
    loop: start=0, step=1, limit=4
    $region2: #{tpu_custom_call.1} parent=1 // loop_pre_header
      _
    $region3: #{tpu_custom_call.1} parent=1 // loop_header
      %s18 = sphi 0, %s22
      %p19 = scmp.ge.s32.totalorder %s18, 4
      %s25 = sphi 0, %s37
      %s26 = sphi 0, %s33
      %s27 = sphi 0, %s25
      %s28 = sphi 0, %s26
      %s29 = sphi 0, %s27
      %s30 = sphi 0, %s28
      %s40 = sphi 0, %s42
      %s43 = sphi 0, %s40
      %s44 = sphi 0, %s43
      %s60 = sphi 0, %s44
      %s64 = sphi 0, %s64
      %s66 = sphi 0, %s64
      %s67 = sphi 0, %s66
      %s81 = sphi 0, %s67
      %s85 = sphi 0, %s85
      %s87 = sphi 0, %s85
      %s88 = sphi 0, %s87
      %s102 = sphi 0, %s88
      %s108 = sphi 0, %s110
      %s111 = sphi 0, %s108
      %s112 = sphi 0, %s111
      %s128 = sphi 0, %s112
      %s134 = sphi 0, %s136
      %s137 = sphi 0, %s134
      %s138 = sphi 0, %s137
      %s154 = sphi 0, %s138
      %s162 = sphi 0, %s164
      %s165 = sphi 0, %s162
      %s166 = sphi 0, %s165
      %s182 = sphi 0, %s166
    $region4: #{tpu_custom_call.1} parent=1 // loop_header_branch
      %21 = sbr.rel (%p19) target = $region8
    $region5: #{tpu_custom_call.1} parent=1 // loop_body
      %s23 = ssub.s32 %s18, 1
      %s24 = ssub.s32 %s18, 2
      %s31 = sadd.s32 1, %s26
      %p32 = scmp.ge.s32.totalorder %s31, 1
      %s33 = scalar_select %p32, 0, %s31
      %s34 = sadd.s32 1, %s25
      %s35 = scalar_select %p32, %s34, %s25
      %p36 = scmp.ge.s32.totalorder %s35, 2
      %s37 = scalar_select %p36, 0, %s35
      %s38 = ssub.s32 %s25, %s37
      %p39 = scmp.eq.s32.totalorder %s38, 0
      %s41 = sadd.s32 %s40, 1
      %s42 = scalar_select %p39, %s40, %s41
      %p45 = pneg %p39
      %p46 = scmp.eq.s32.totalorder %s18, 1
      %p47 = por %p45, %p46
      %p48 = scmp.ne.s32.totalorder %s40, %s43
      %p49 = scmp.eq.s32.totalorder %s18, 0
      %p50 = por %p48, %p49
      %p51 = scmp.ne.s32.totalorder %s40, %s43
      %p52 = scmp.eq.s32.totalorder %s23, 1
      %p53 = por %p51, %p52
      %p54 = scmp.ne.s32.totalorder %s43, %s44
      %p55 = scmp.eq.s32.totalorder %s23, 0
      %p56 = por %p54, %p55
      %p57 = scmp.ne.s32.totalorder %s43, %s44
      %p58 = scmp.eq.s32.totalorder %s24, 1
      %p59 = por %p57, %p58
      %p61 = scmp.ne.s32.totalorder %s44, %s60
      %p62 = scmp.eq.s32.totalorder %s24, 0
      %p63 = por %p61, %p62
      %s65 = sadd.s32 %s64, 1
      %p68 = scmp.eq.s32.totalorder %s18, 1
      %p69 = scmp.ne.s32.totalorder %s64, %s66
      %p70 = scmp.eq.s32.totalorder %s18, 0
      %p71 = por %p69, %p70
      %p72 = scmp.ne.s32.totalorder %s64, %s66
      %p73 = scmp.eq.s32.totalorder %s23, 1
      %p74 = por %p72, %p73
      %p75 = scmp.ne.s32.totalorder %s66, %s67
      %p76 = scmp.eq.s32.totalorder %s23, 0
      %p77 = por %p75, %p76
      %p78 = scmp.ne.s32.totalorder %s66, %s67
      %p79 = scmp.eq.s32.totalorder %s24, 1
      %p80 = por %p78, %p79
      %p82 = scmp.ne.s32.totalorder %s67, %s81
      %p83 = scmp.eq.s32.totalorder %s24, 0
      %p84 = por %p82, %p83
      %s86 = sadd.s32 %s85, 1
      %p89 = scmp.eq.s32.totalorder %s18, 1
      %p90 = scmp.ne.s32.totalorder %s85, %s87
      %p91 = scmp.eq.s32.totalorder %s18, 0
      %p92 = por %p90, %p91
      %p93 = scmp.ne.s32.totalorder %s85, %s87
      %p94 = scmp.eq.s32.totalorder %s23, 1
      %p95 = por %p93, %p94
      %p96 = scmp.ne.s32.totalorder %s87, %s88
      %p97 = scmp.eq.s32.totalorder %s23, 0
      %p98 = por %p96, %p97
      %p99 = scmp.ne.s32.totalorder %s87, %s88
      %p100 = scmp.eq.s32.totalorder %s24, 1
      %p101 = por %p99, %p100
      %p103 = scmp.ne.s32.totalorder %s88, %s102
      %p104 = scmp.eq.s32.totalorder %s24, 0
      %p105 = por %p103, %p104
      %s106 = ssub.s32 %s26, %s33
      %p107 = scmp.eq.s32.totalorder %s106, 0
      %s109 = sadd.s32 %s108, 1
      %s110 = scalar_select %p107, %s108, %s109
      %p113 = pneg %p107
      %p114 = scmp.eq.s32.totalorder %s18, 1
      %p115 = por %p113, %p114
      %p116 = scmp.ne.s32.totalorder %s108, %s111
      %p117 = scmp.eq.s32.totalorder %s18, 0
      %p118 = por %p116, %p117
      %p119 = scmp.ne.s32.totalorder %s108, %s111
      %p120 = scmp.eq.s32.totalorder %s23, 1
      %p121 = por %p119, %p120
      %p122 = scmp.ne.s32.totalorder %s111, %s112
      %p123 = scmp.eq.s32.totalorder %s23, 0
      %p124 = por %p122, %p123
      %p125 = scmp.ne.s32.totalorder %s111, %s112
      %p126 = scmp.eq.s32.totalorder %s24, 1
      %p127 = por %p125, %p126
      %p129 = scmp.ne.s32.totalorder %s112, %s128
      %p130 = scmp.eq.s32.totalorder %s24, 0
      %p131 = por %p129, %p130
      %s132 = ssub.s32 %s26, %s33
      %p133 = scmp.eq.s32.totalorder %s132, 0
      %s135 = sadd.s32 %s134, 1
      %s136 = scalar_select %p133, %s134, %s135
      %p139 = pneg %p133
      %p140 = scmp.eq.s32.totalorder %s18, 1
      %p141 = por %p139, %p140
      %p142 = scmp.ne.s32.totalorder %s134, %s137
      %p143 = scmp.eq.s32.totalorder %s18, 0
      %p144 = por %p142, %p143
      %p145 = scmp.ne.s32.totalorder %s134, %s137
      %p146 = scmp.eq.s32.totalorder %s23, 1
      %p147 = por %p145, %p146
      %p148 = scmp.ne.s32.totalorder %s137, %s138
      %p149 = scmp.eq.s32.totalorder %s23, 0
      %p150 = por %p148, %p149
      %p151 = scmp.ne.s32.totalorder %s137, %s138
      %p152 = scmp.eq.s32.totalorder %s24, 1
      %p153 = por %p151, %p152
      %p155 = scmp.ne.s32.totalorder %s138, %s154
      %p156 = scmp.eq.s32.totalorder %s24, 0
      %p157 = por %p155, %p156
      %s158 = ssub.s32 %s25, %s37
      %s159 = ssub.s32 %s26, %s33
      %s160 = sor.u32 %s158, %s159
      %p161 = scmp.eq.s32.totalorder %s160, 0
      %s163 = sadd.s32 %s162, 1
      %s164 = scalar_select %p161, %s162, %s163
      %p167 = pneg %p161
      %p168 = scmp.eq.s32.totalorder %s18, 1
      %p169 = por %p167, %p168
      %p170 = scmp.ne.s32.totalorder %s162, %s165
      %p171 = scmp.eq.s32.totalorder %s18, 0
      %p172 = por %p170, %p171
      %p173 = scmp.ne.s32.totalorder %s162, %s165
      %p174 = scmp.eq.s32.totalorder %s23, 1
      %p175 = por %p173, %p174
      %p176 = scmp.ne.s32.totalorder %s165, %s166
      %p177 = scmp.eq.s32.totalorder %s23, 0
      %p178 = por %p176, %p177
      %p179 = scmp.ne.s32.totalorder %s165, %s166
      %p180 = scmp.eq.s32.totalorder %s24, 1
      %p181 = por %p179, %p180
      %p183 = scmp.ne.s32.totalorder %s166, %s182
      %p184 = scmp.eq.s32.totalorder %s24, 0
      %p185 = por %p183, %p184
      %p186 = scmp.le.s32.totalorder 1, %s18
      %p187 = scmp.lt.s32.totalorder %s18, 3
      %p188 = pnand %p186, %p187
      %p189 = pneg %p188
      // Predicated region
      $region9: #{tpu_custom_call.1} parent=5 // pred_check
        _
      $region10: #{tpu_custom_call.1} parent=5 // pred_check_branch
        %191 = sbr.rel (%p188) target = $region12
      $region11: #{tpu_custom_call.1} parent=5 // pred_region
        %s192 = ssub.s32 %s18, 1
        // Predicated region
        $region13: #{tpu_custom_call.1} parent=11 // pred_check
          %p193 = pneg %p77
        $region14: #{tpu_custom_call.1} parent=11 // pred_check_branch
          %195 = sbr.rel (%p193) target = $region16
        $region15: #{tpu_custom_call.1} parent=11 // pred_region
          %s197 = ssub.s32 1024, 1024
          %198 = vsyncadd [#allocation7], %s197
          %s199 = sshll.u32 [#allocation6], 4
          %s200 = int_to_ptr.vmem [resolvable:$true] %s199
          %205 = dma.hbm_to_vmem [thread:$0]  %s1, 1024, %s200, [#allocation7], 64, 64, 4
        $region16: #{tpu_custom_call.1} parent=11 // pred_fallthru
          _
        // Predicated region
        $region17: #{tpu_custom_call.1} parent=11 // pred_check
          %p206 = pneg %p98
        $region18: #{tpu_custom_call.1} parent=11 // pred_check_branch
          %208 = sbr.rel (%p206) target = $region20
        $region19: #{tpu_custom_call.1} parent=11 // pred_region
          _
        $region20: #{tpu_custom_call.1} parent=11 // pred_fallthru
          _
        // Predicated region
        $region21: #{tpu_custom_call.1} parent=11 // pred_check
          %p209 = pneg %p124
        $region22: #{tpu_custom_call.1} parent=11 // pred_check_branch
          %211 = sbr.rel (%p209) target = $region24
        $region23: #{tpu_custom_call.1} parent=11 // pred_region
          %s213 = ssub.s32 1024, 1024
          %214 = vsyncadd [#allocation7], %s213
          %s215 = smul.addr %s28, 64
          %s216 = scalar_lea.hbm %s3, %s215
          %s217 = sshll.u32 [#allocation8], 4
          %s218 = int_to_ptr.vmem [resolvable:$true] %s217
          %223 = dma.hbm_to_vmem [thread:$0]  %s216, 1024, %s218, [#allocation7], 64, 64, 4
        $region24: #{tpu_custom_call.1} parent=11 // pred_fallthru
          _
        // Predicated region
        $region25: #{tpu_custom_call.1} parent=11 // pred_check
          %p224 = pneg %p150
        $region26: #{tpu_custom_call.1} parent=11 // pred_check_branch
          %226 = sbr.rel (%p224) target = $region28
        $region27: #{tpu_custom_call.1} parent=11 // pred_region
          %p227 = scmp.lt.s32.totalorder %s28, 0
          %s228 = scalar_select %p227, %s28, 0
          %s229 = scalar_lea.vmem %s4, %s228
        $region28: #{tpu_custom_call.1} parent=11 // pred_fallthru
          _
      $region12: #{tpu_custom_call.1} parent=5 // pred_fallthru
        _
      %p230 = scmp.lt.s32.totalorder %s18, 2
      // Predicated region
      $region29: #{tpu_custom_call.1} parent=5 // pred_check
        %p231 = pneg %p230
      $region30: #{tpu_custom_call.1} parent=5 // pred_check_branch
        %233 = sbr.rel (%p231) target = $region32
      $region31: #{tpu_custom_call.1} parent=5 // pred_region
        // Predicated region
        $region33: #{tpu_custom_call.1} parent=31 // pred_check
          %p234 = pneg %p50
        $region34: #{tpu_custom_call.1} parent=31 // pred_check_branch
          %236 = sbr.rel (%p234) target = $region36
        $region35: #{tpu_custom_call.1} parent=31 // pred_region
          %s237 = sand.u32 %s40, 1
          %s238 = scalar_lea.sflag [#allocation4], %s237
          %s239 = sand.u32 %s40, 1
          %s240 = smul.addr %s239, 8
          %s241 = scalar_lea.vmem [#allocation3], %s240
          %s242 = smul.u32 2, %s25
          %s244 = ssub.s32 128, 128
          %245 = vsyncadd %s238, %s244
          %s246 = smul.addr %s242, 64
          %s247 = scalar_lea.hbm %s0, %s246
          %s248 = sshll.u32 %s241, 4
          %s249 = int_to_ptr.vmem [resolvable:$true] %s248
          %254 = dma.hbm_to_vmem [thread:$0]  %s247, 128, %s249, %s238, 64, 64, 4
        $region36: #{tpu_custom_call.1} parent=31 // pred_fallthru
          _
      $region32: #{tpu_custom_call.1} parent=5 // pred_fallthru
        _
      %p255 = scmp.le.s32.totalorder 1, %s18
      %p256 = scmp.lt.s32.totalorder %s18, 3
      %p257 = pnand %p255, %p256
      %p258 = pneg %p257
      // Predicated region
      $region37: #{tpu_custom_call.1} parent=5 // pred_check
        _
      $region38: #{tpu_custom_call.1} parent=5 // pred_check_branch
        %260 = sbr.rel (%p257) target = $region40
      $region39: #{tpu_custom_call.1} parent=5 // pred_region
        %s261 = ssub.s32 %s18, 1
        %s262 = sand.u32 %s43, 1
        %s263 = scalar_lea.sflag [#allocation4], %s262
        %s264 = sand.u32 %s43, 1
        %s265 = smul.addr %s264, 8
        %s266 = scalar_lea.vmem [#allocation3], %s265
        // Predicated region
        $region41: #{tpu_custom_call.1} parent=39 // pred_check
          %p267 = pneg %p56
        $region42: #{tpu_custom_call.1} parent=39 // pred_check_branch
          %269 = sbr.rel (%p267) target = $region44
        $region43: #{tpu_custom_call.1} parent=39 // pred_region
          %270 = dma.done %s263, 128
        $region44: #{tpu_custom_call.1} parent=39 // pred_fallthru
          _
        // Predicated region
        $region45: #{tpu_custom_call.1} parent=39 // pred_check
          %p271 = pneg %p77
        $region46: #{tpu_custom_call.1} parent=39 // pred_check_branch
          %273 = sbr.rel (%p271) target = $region48
        $region47: #{tpu_custom_call.1} parent=39 // pred_region
          %274 = dma.done [#allocation7], 1024
        $region48: #{tpu_custom_call.1} parent=39 // pred_fallthru
          _
        // Predicated region
        $region49: #{tpu_custom_call.1} parent=39 // pred_check
          %p275 = pneg %p124
        $region50: #{tpu_custom_call.1} parent=39 // pred_check_branch
          %277 = sbr.rel (%p275) target = $region52
        $region51: #{tpu_custom_call.1} parent=39 // pred_region
          %278 = dma.done [#allocation7], 1024
        $region52: #{tpu_custom_call.1} parent=39 // pred_fallthru
          _
        %s279 = sand.u32 %s43, 1
        %s280 = scalar_lea.sflag [#allocation4], %s279
        %s281 = sand.u32 %s43, 1
        %s282 = smul.addr %s281, 8
        %s283 = scalar_lea.vmem [#allocation3], %s282
        %p284 = pneg %p56
        %p285 = pneg %p53
        %p286 = pneg %p77
        %p287 = pneg %p74
        %p288 = pneg %p98
        %p289 = pneg %p95
        %p290 = pneg %p124
        %p291 = pneg %p121
        %p292 = scmp.lt.s32.totalorder %s28, 0
        %s293 = scalar_select %p292, %s28, 0
        %s294 = scalar_lea.vmem %s4, %s293
        %p295 = pneg %p150
        %p296 = pneg %p147
        %p297 = pneg %p178
        %p298 = pneg %p175
        %s299 = sand.u32 %s165, 1
        %s300 = scalar_lea.sflag [#allocation5], %s299
        %s301 = sand.u32 %s165, 1
        %s302 = smul.addr %s301, 8
        %s303 = scalar_lea.vmem [#allocation9], %s302
        %s304 = smul.u32 2, %s27
        %p305 = scmp.lt.s32.totalorder %s28, 0
        %s306 = scalar_select %p305, %s28, 0
        %s307 = scalar_lea.vmem %s4, %s306
        %s308 = smul.u32 2, %s27
        %p310 = scmp.eq.s32.totalorder %s28, 0
        // Predicated region
        $region53: #{tpu_custom_call.1} parent=39 // pred_check
          %p311 = pneg %p310
        $region54: #{tpu_custom_call.1} parent=39 // pred_check_branch
          %313 = sbr.rel (%p311) target = $region56
        $region55: #{tpu_custom_call.1} parent=39 // pred_region
          %v314 = vld [vmem:[%s266] sm:$0xf]
          %v315 = vld [vmem:[%s266 + $0x4] sm:$0xf]
          %v316 = vld [vmem:[#allocation6] sm:$0xf]
          %v317 = vld [vmem:[#allocation6 + $0x4] sm:$0xf]
          %v318 = vld [vmem:[#allocation6 + $0x8] sm:$0xf]
          %v319 = vld [vmem:[#allocation6 + $0xc] sm:$0xf]
          %v320 = vld [vmem:[#allocation6 + $0x10] sm:$0xf]
          %v321 = vld [vmem:[#allocation6 + $0x14] sm:$0xf]
          %v322 = vld [vmem:[#allocation6 + $0x18] sm:$0xf]
          %v323 = vld [vmem:[#allocation6 + $0x1c] sm:$0xf]
          %v324 = vld [vmem:[#allocation6 + $0x20] sm:$0xf]
          %v325 = vld [vmem:[#allocation6 + $0x24] sm:$0xf]
          %v326 = vld [vmem:[#allocation6 + $0x28] sm:$0xf]
          %v327 = vld [vmem:[#allocation6 + $0x2c] sm:$0xf]
          %v328 = vld [vmem:[#allocation6 + $0x30] sm:$0xf]
          %v329 = vld [vmem:[#allocation6 + $0x34] sm:$0xf]
          %v330 = vld [vmem:[#allocation6 + $0x38] sm:$0xf]
          %v331 = vld [vmem:[#allocation6 + $0x3c] sm:$0xf]
          %v332 = vld [vmem:[%s2] sm:$0x1]
          %v334 = vlaneseq
          %v335 = vshrl.u32 %v334, 7
          %v336 = vsub.s32 0, %v335
          %v337 = vrot.slane %v332, %v336
          %v341 = vunpack.c.l.b16 %v314
          %v342 = vunpack.c.l.b16 %v315
          %v343 = vpack.c.b16 %v342, %v341
          %v361 = vunpack.c.l.b16 %v316
          %v362 = vunpack.c.l.b16 %v317
          %v363 = vunpack.c.l.b16 %v318
          %v364 = vunpack.c.l.b16 %v319
          %v365 = vunpack.c.l.b16 %v320
          %v366 = vunpack.c.l.b16 %v321
          %v367 = vunpack.c.l.b16 %v322
          %v368 = vunpack.c.l.b16 %v323
          %v369 = vunpack.c.l.b16 %v324
          %v370 = vunpack.c.l.b16 %v325
          %v371 = vunpack.c.l.b16 %v326
          %v372 = vunpack.c.l.b16 %v327
          %v373 = vunpack.c.l.b16 %v328
          %v374 = vunpack.c.l.b16 %v329
          %v375 = vunpack.c.l.b16 %v330
          %v376 = vunpack.c.l.b16 %v331
          %v377 = vpack.c.b16 %v362, %v361
          %v378 = vpack.c.b16 %v364, %v363
          %v379 = vpack.c.b16 %v366, %v365
          %v380 = vpack.c.b16 %v368, %v367
          %v381 = vpack.c.b16 %v370, %v369
          %v382 = vpack.c.b16 %v372, %v371
          %v383 = vpack.c.b16 %v374, %v373
          %v384 = vpack.c.b16 %v376, %v375
          %393 = vmatprep.subr.bf16.mxu0 0
          %394 = vmatpush1.bf16.msra.mxu0 %v377
          %395 = vmatprep.subr.bf16.mxu0 0
          %396 = vmatpush1.bf16.msra.mxu0 %v378
          %397 = vmatprep.subr.bf16.mxu0 0
          %398 = vmatpush1.bf16.msra.mxu0 %v379
          %399 = vmatprep.subr.bf16.mxu0 0
          %400 = vmatpush1.bf16.msra.mxu0 %v380
          %401 = vmatprep.subr.bf16.mxu0 0
          %402 = vmatpush1.bf16.msra.mxu0 %v381
          %403 = vmatprep.subr.bf16.mxu0 0
          %404 = vmatpush1.bf16.msra.mxu0 %v382
          %405 = vmatprep.subr.bf16.mxu0 0
          %406 = vmatpush1.bf16.msra.mxu0 %v383
          %407 = vmatprep.subr.bf16.mxu0 0
          %408 = vmatpush1.bf16.msra.mxu0 %v384
          %409 = vmatprep.subr.bf16.mxu0 0
          %410 = vmatpush1.bf16.msra.mxu0 0
          %411 = vmatprep.subr.bf16.mxu0 0
          %412 = vmatpush1.bf16.msra.mxu0 0
          %413 = vmatprep.subr.bf16.mxu0 0
          %414 = vmatpush1.bf16.msra.mxu0 0
          %415 = vmatprep.subr.bf16.mxu0 0
          %416 = vmatpush1.bf16.msra.mxu0 0
          %417 = vmatprep.subr.bf16.mxu0 0
          %418 = vmatpush1.bf16.msra.mxu0 0
          %419 = vmatprep.subr.bf16.mxu0 0
          %420 = vmatpush1.bf16.msra.mxu0 0
          %421 = vmatprep.subr.bf16.mxu0 0
          %422 = vmatpush1.bf16.msra.mxu0 0
          %423 = vmatprep.subr.bf16.mxu0 0
          %424 = vmatpush1.bf16.msra.mxu0 0
          %425 = vmatprep.mubr.bf16.mxu0 0
          %426 = vmatmul.mubr.bf16.gmra.mrb[0].mxu0 %v343
          %v427 = vpop.f32.mrb[0].mxu0
          %v428 = vadd.f32 %v337, %v427
          %v429 = vpop.f32.mrb[0].mxu0
          %v430 = vpop.f32.mrb[0].mxu0
          %v431 = vadd.f32 %v337, %v430
          %v432 = vpop.f32.mrb[0].mxu0
          %433 = vdwg.mxu0
          %v434 = vtanh.pop %v428
          %v435 = vtanh.pop %v431
          %v436 = vpack.c.bf16 %v435, %v434
          %437 = vst [vmem:[#allocation2] sm:$0xff] %v436
        $region56: #{tpu_custom_call.1} parent=39 // pred_fallthru
          _
        %v438 = vld [vmem:[#allocation2] sm:$0xff]
        %v439 = vld [vmem:[#allocation8] sm:$0xf]
        %v440 = vld [vmem:[#allocation8 + $0x4] sm:$0xf]
        %v441 = vld [vmem:[#allocation8 + $0x8] sm:$0xf]
        %v442 = vld [vmem:[#allocation8 + $0xc] sm:$0xf]
        %v443 = vld [vmem:[#allocation8 + $0x10] sm:$0xf]
        %v444 = vld [vmem:[#allocation8 + $0x14] sm:$0xf]
        %v445 = vld [vmem:[#allocation8 + $0x18] sm:$0xf]
        %v446 = vld [vmem:[#allocation8 + $0x1c] sm:$0xf]
        %v447 = vld [vmem:[#allocation8 + $0x20] sm:$0xf]
        %v448 = vld [vmem:[#allocation8 + $0x24] sm:$0xf]
        %v449 = vld [vmem:[#allocation8 + $0x28] sm:$0xf]
        %v450 = vld [vmem:[#allocation8 + $0x2c] sm:$0xf]
        %v451 = vld [vmem:[#allocation8 + $0x30] sm:$0xf]
        %v452 = vld [vmem:[#allocation8 + $0x34] sm:$0xf]
        %v453 = vld [vmem:[#allocation8 + $0x38] sm:$0xf]
        %v454 = vld [vmem:[#allocation8 + $0x3c] sm:$0xf]
        %v455 = vld [vmem:[%s307] sm:$0x1]
        %v457 = vlaneseq
        %v458 = vshrl.u32 %v457, 7
        %v459 = vsub.s32 0, %v458
        %v460 = vrot.slane %v455, %v459
        %v478 = vunpack.c.l.b16 %v439
        %v479 = vunpack.c.l.b16 %v440
        %v480 = vunpack.c.l.b16 %v441
        %v481 = vunpack.c.l.b16 %v442
        %v482 = vunpack.c.l.b16 %v443
        %v483 = vunpack.c.l.b16 %v444
        %v484 = vunpack.c.l.b16 %v445
        %v485 = vunpack.c.l.b16 %v446
        %v486 = vunpack.c.l.b16 %v447
        %v487 = vunpack.c.l.b16 %v448
        %v488 = vunpack.c.l.b16 %v449
        %v489 = vunpack.c.l.b16 %v450
        %v490 = vunpack.c.l.b16 %v451
        %v491 = vunpack.c.l.b16 %v452
        %v492 = vunpack.c.l.b16 %v453
        %v493 = vunpack.c.l.b16 %v454
        %v494 = vpack.c.b16 %v479, %v478
        %v495 = vpack.c.b16 %v481, %v480
        %v496 = vpack.c.b16 %v483, %v482
        %v497 = vpack.c.b16 %v485, %v484
        %v498 = vpack.c.b16 %v487, %v486
        %v499 = vpack.c.b16 %v489, %v488
        %v500 = vpack.c.b16 %v491, %v490
        %v501 = vpack.c.b16 %v493, %v492
        %510 = vmatprep.subr.bf16.mxu0 0
        %511 = vmatpush1.bf16.msra.mxu0 %v494
        %512 = vmatprep.subr.bf16.mxu0 0
        %513 = vmatpush1.bf16.msra.mxu0 %v495
        %514 = vmatprep.subr.bf16.mxu0 0
        %515 = vmatpush1.bf16.msra.mxu0 %v496
        %516 = vmatprep.subr.bf16.mxu0 0
        %517 = vmatpush1.bf16.msra.mxu0 %v497
        %518 = vmatprep.subr.bf16.mxu0 0
        %519 = vmatpush1.bf16.msra.mxu0 %v498
        %520 = vmatprep.subr.bf16.mxu0 0
        %521 = vmatpush1.bf16.msra.mxu0 %v499
        %522 = vmatprep.subr.bf16.mxu0 0
        %523 = vmatpush1.bf16.msra.mxu0 %v500
        %524 = vmatprep.subr.bf16.mxu0 0
        %525 = vmatpush1.bf16.msra.mxu0 %v501
        %526 = vmatprep.subr.bf16.mxu0 0
        %527 = vmatpush1.bf16.msra.mxu0 0
        %528 = vmatprep.subr.bf16.mxu0 0
        %529 = vmatpush1.bf16.msra.mxu0 0
        %530 = vmatprep.subr.bf16.mxu0 0
        %531 = vmatpush1.bf16.msra.mxu0 0
        %532 = vmatprep.subr.bf16.mxu0 0
        %533 = vmatpush1.bf16.msra.mxu0 0
        %534 = vmatprep.subr.bf16.mxu0 0
        %535 = vmatpush1.bf16.msra.mxu0 0
        %536 = vmatprep.subr.bf16.mxu0 0
        %537 = vmatpush1.bf16.msra.mxu0 0
        %538 = vmatprep.subr.bf16.mxu0 0
        %539 = vmatpush1.bf16.msra.mxu0 0
        %540 = vmatprep.subr.bf16.mxu0 0
        %541 = vmatpush1.bf16.msra.mxu0 0
        %542 = vmatprep.mubr.bf16.mxu0 0
        %543 = vmatmul.mubr.bf16.gmra.mrb[0].mxu0 %v438
        %v544 = vpop.f32.mrb[0].mxu0
        %v545 = vadd.f32 %v460, %v544
        %v546 = vpop.f32.mrb[0].mxu0
        %v547 = vpop.f32.mrb[0].mxu0
        %v548 = vadd.f32 %v460, %v547
        %v549 = vpop.f32.mrb[0].mxu0
        %550 = vdwg.mxu0
        %v551 = vpack.c.bf16 %v548, %v545
        %v553 = vunpack.c.l.b16 %v551
        %v554 = vunpack.c.h.b16 %v551
        %v555 = vpack.c.b16 %v553, %v553
        %v556 = vpack.c.b16 %v554, %v554
        %559 = vst [vmem:[%s303] sm:$0xf] %v555
        %560 = vst [vmem:[%s303 + $0x4] sm:$0xf] %v556
        %s561 = sand.u32 %s165, 1
        %s562 = scalar_lea.sflag [#allocation5], %s561
        %s563 = sand.u32 %s165, 1
        %s564 = smul.addr %s563, 8
        %s565 = scalar_lea.vmem [#allocation9], %s564
        // Predicated region
        $region57: #{tpu_custom_call.1} parent=39 // pred_check
          %p566 = pneg %p175
        $region58: #{tpu_custom_call.1} parent=39 // pred_check_branch
          %568 = sbr.rel (%p566) target = $region60
        $region59: #{tpu_custom_call.1} parent=39 // pred_region
          %s569 = smul.u32 2, %s27
          %s571 = ssub.s32 128, 128
          %572 = vsyncadd %s562, %s571
          %s573 = sadd.s32 %s28, %s569
          %s574 = smul.addr %s573, 64
          %s575 = scalar_lea.hbm %s5, %s574
          %s576 = sshll.u32 %s565, 4
          %s577 = int_to_ptr.vmem [resolvable:$true] %s576
          %582 = dma.vmem_to_hbm [thread:$0]  %s577, 128, %s575, %s562, 64, 64, 4
        $region60: #{tpu_custom_call.1} parent=39 // pred_fallthru
          _
      $region40: #{tpu_custom_call.1} parent=5 // pred_fallthru
        _
      %p583 = scmp.le.s32.totalorder 2, %s18
      // Predicated region
      $region61: #{tpu_custom_call.1} parent=5 // pred_check
        %p584 = pneg %p583
      $region62: #{tpu_custom_call.1} parent=5 // pred_check_branch
        %586 = sbr.rel (%p584) target = $region64
      $region63: #{tpu_custom_call.1} parent=5 // pred_region
        %s587 = ssub.s32 %s18, 2
        // Predicated region
        $region65: #{tpu_custom_call.1} parent=63 // pred_check
          %p588 = pneg %p181
        $region66: #{tpu_custom_call.1} parent=63 // pred_check_branch
          %590 = sbr.rel (%p588) target = $region68
        $region67: #{tpu_custom_call.1} parent=63 // pred_region
          %s591 = sand.u32 %s166, 1
          %s592 = scalar_lea.sflag [#allocation5], %s591
          %s593 = sand.u32 %s166, 1
          %s594 = smul.addr %s593, 8
          %s595 = scalar_lea.vmem [#allocation9], %s594
          %596 = dma.done %s592, 128
        $region68: #{tpu_custom_call.1} parent=63 // pred_fallthru
          _
      $region64: #{tpu_custom_call.1} parent=5 // pred_fallthru
        _
    $region6: #{tpu_custom_call.1} parent=1 // loop_footer
      %s22 = sadd.s32 1, %s18
    $region7: #{tpu_custom_call.1} parent=1 // loop_footer_branch
      %17 = sbr.rel target = $region3
    $region8: #{tpu_custom_call.1} parent=1 // loop_exit
      _
    %597 = vsyncpa [#allocation4], 1
    %s598 = scalar_lea.sflag [#allocation4], 1
    %599 = vsyncpa %s598, 1
    %600 = vsyncpa [#allocation7], 1
    %601 = vsyncpa [#allocation5], 1
    %s602 = scalar_lea.sflag [#allocation5], 1
    %603 = vsyncpa %s602, 1

</llo_original>
